<compile_context>
chip_gen: v7x
topology: tpu7x:2x2x1
jax: 0.10.0
libtpu: 0.0.40
codegen_flags: <defaults>
</compile_context>

<pallas_src>
import functools

import jax
import jax.numpy as jnp
from jax.experimental import pallas as pl
from jax.experimental.pallas import tpu as pltpu

_LANE = 128
_SUBLANE = 8


def _round_up(n, m):
    return ((n + m - 1) // m) * m


def _mlp_kernel(x_ref, w1_ref, b1_ref, w2_ref, b2_ref, w3_ref, b3_ref, o_ref):
    w_dtype = w1_ref.dtype  # f32 by default; bf16 if prepare_policy_params used bf16
    # Layer 1: Linear + ReLU  (K = true input size, no feature padding)
    h1 = jnp.dot(x_ref[...].astype(w_dtype), w1_ref[...],
                 preferred_element_type=jnp.float32)
    h1 = jnp.maximum(h1 + b1_ref[...], 0.0)
    # Layer 2: Linear + ReLU
    h2 = jnp.dot(h1.astype(w_dtype), w2_ref[...],
                 preferred_element_type=jnp.float32)
    h2 = jnp.maximum(h2 + b2_ref[...], 0.0)
    # Output layer: Linear + Tanh (lane-dense padded output slab)
    out = jnp.dot(h2.astype(w_dtype), w3_ref[...],
                  preferred_element_type=jnp.float32)
    out = jnp.tanh(out + b3_ref[...])
    o_ref[...] = out.astype(o_ref.dtype)


def prepare_policy_params(params, compute_dtype=jnp.float32):
    """One-time prep: transpose PyTorch-layout weights ([out, in]) -> [in, out].

    Output feature dims are zero-padded to multiples of 128 lanes; the layer-1 input (K)
    dim is left UNPADDED so the kernel reads the raw activation tile.  Biases are kept in
    f32 as [1, out_pad].  Weights may optionally be stored in bf16 (f32 accumulation in
    the kernel keeps accuracy to ~1e-2)."""
    prepped = {}
    prev_out_pad = None
    for i in (1, 2, 3):
        w = jnp.asarray(params[f"w{i}"], jnp.float32)  # [out, in]
        b = jnp.asarray(params[f"b{i}"], jnp.float32)  # [out]
        out_f, in_f = w.shape
        in_p = in_f if i == 1 else prev_out_pad        # K of layer 1 stays unpadded
        out_p = _round_up(out_f, _LANE)
        w_pad = jnp.zeros((in_p, out_p), jnp.float32).at[:in_f, :out_f].set(w.T)
        prepped[f"w{i}"] = w_pad.astype(compute_dtype)
        prepped[f"b{i}"] = jnp.zeros((1, out_p), jnp.float32).at[0, :out_f].set(b)
        prev_out_pad = out_p
    return prepped


@functools.partial(jax.jit, static_argnums=(2, 3))
def policy_network_forward(x, prepped, output_size, block_rows=2048):
    """x: [batch, input_size] f32; prepped: output of prepare_policy_params."""
    w1, b1 = prepped["w1"], prepped["b1"]
    w2, b2 = prepped["w2"], prepped["b2"]
    w3, b3 = prepped["w3"], prepped["b3"]

    in_f, h1p = w1.shape
    h2p = w2.shape[1]
    out_p = w3.shape[1]

    batch = x.shape[0]
    assert x.shape[1] == in_f, "input feature dim must match prepared w1"

    # Pad batch only to 8 sublanes (cheap, at most 7 extra rows), never to a full tile.
    batch_p8 = _round_up(batch, _SUBLANE)
    if batch_p8 != batch:
        x_in = jnp.zeros((batch_p8, in_f), x.dtype).at[:batch].set(x)
    else:
        x_in = x

    # Batch tile selection:
    #  * large batches: big tiles (default 2048 rows) to amortize per-grid-step overhead,
    #  * small/medium batches: split into >= 2 tiles so v7x's second TensorCore gets work,
    #  * ragged final block is handled (masked) by Pallas via pl.cdiv.
    max_tb = max(_SUBLANE, (int(block_rows) // _SUBLANE) * _SUBLANE)
    if batch_p8 <= _SUBLANE:
        tb = _SUBLANE
    elif batch_p8 <= 2 * max_tb:
        tb = _round_up(pl.cdiv(batch_p8, 2), _SUBLANE)
    else:
        tb = max_tb
    grid = (pl.cdiv(batch_p8, tb),)

    # Honest HBM/flop hints (real, unpadded-input footprint).
    w_bytes = (w1.size * w1.dtype.itemsize + w2.size * w2.dtype.itemsize
               + w3.size * w3.dtype.itemsize)
    b_bytes = 4 * (h1p + h2p + out_p)
    flops = 2 * batch_p8 * (in_f * h1p + h1p * h2p + h2p * out_p)
    bytes_accessed = (batch_p8 * in_f * x.dtype.itemsize
                      + w_bytes + b_bytes
                      + batch_p8 * out_p * x.dtype.itemsize)

    out_padded = pl.pallas_call(
        _mlp_kernel,
        out_shape=jax.ShapeDtypeStruct((batch_p8, out_p), x.dtype),
        grid=grid,
        in_specs=[
            # Activations: tiled along batch, last dim = full array dim (no lane padding).
            pl.BlockSpec((tb, in_f), lambda i: (i, 0)),
            # Weights / biases: un-blocked, VMEM-resident across all grid steps.
            pl.BlockSpec((in_f, h1p), lambda i: (0, 0)),
            pl.BlockSpec((1, h1p), lambda i: (0, 0)),
            pl.BlockSpec((h1p, h2p), lambda i: (0, 0)),
            pl.BlockSpec((1, h2p), lambda i: (0, 0)),
            pl.BlockSpec((h2p, out_p), lambda i: (0, 0)),
            pl.BlockSpec((1, out_p), lambda i: (0, 0)),
        ],
        # Keep the lane-dense 128-wide output slab (sub-128 stores lower to slow vst.msk).
        out_specs=pl.BlockSpec((tb, out_p), lambda i: (i, 0)),
        compiler_params=pltpu.CompilerParams(
            dimension_semantics=("parallel",),   # batch tiles shard across v7x's 2 TCs
            vmem_limit_bytes=48 * 1024 * 1024,   # safe on v5e/v6e (128 MiB) and v7x (64 MiB)
        ),
        cost_estimate=pl.CostEstimate(
            flops=flops,
            transcendentals=batch_p8 * out_p,
            bytes_accessed=bytes_accessed,
        ),
    )(x_in, w1, b1, w2, b2, w3, b3)

    return out_padded[:batch, :output_size]


def init_policy_params(key, input_size, output_size, hidden_layers=(64, 64)):
    """Deterministic init mimicking nn.Linear default (U[-1/sqrt(fan_in), 1/sqrt(fan_in)])."""
    sizes = [input_size] + list(hidden_layers) + [output_size]
    params = {}
    for i in range(len(sizes) - 1):
        fan_in, fan_out = sizes[i], sizes[i + 1]
        key, kw, kb = jax.random.split(key, 3)
        bound = 1.0 / jnp.sqrt(jnp.float32(fan_in))
        params[f"w{i+1}"] = jax.random.uniform(
            kw, (fan_out, fan_in), jnp.float32, minval=-bound, maxval=bound
        )
        params[f"b{i+1}"] = jax.random.uniform(
            kb, (fan_out,), jnp.float32, minval=-bound, maxval=bound
        )
    return params


def _reference_forward(x, params):
    h = x
    h = jnp.maximum(h @ params["w1"].T + params["b1"], 0.0)
    h = jnp.maximum(h @ params["w2"].T + params["b2"], 0.0)
    return jnp.tanh(h @ params["w3"].T + params["b3"])


if __name__ == "__main__":
    key = jax.random.PRNGKey(0)
    key, kx = jax.random.split(key)

    batch = 2
    input_size = 16
    hidden_layers = (64, 64)   # PyTorch module default
    output_size = 4

    x = jax.random.normal(kx, (batch, input_size), dtype=jnp.float32)
    params = init_policy_params(key, input_size, output_size, hidden_layers)
    ref = _reference_forward(x, params)

    # f32 path (bit-accurate vs. the PyTorch-style reference).
    prepped = prepare_policy_params(params)
    out = jax.block_until_ready(policy_network_forward(x, prepped, output_size))
    assert out.shape == (batch, output_size)
    assert jnp.allclose(out, ref, atol=1e-4, rtol=1e-4)

    # Optional bf16-operand path (f32 accumulation) for v6e/v7x HBM-bound speedup.
    prepped_bf16 = prepare_policy_params(params, compute_dtype=jnp.bfloat16)
    out_bf16 = jax.block_until_ready(policy_network_forward(x, prepped_bf16, output_size))
    assert out_bf16.shape == (batch, output_size)
    assert jnp.allclose(out_bf16, ref, atol=2e-2, rtol=2e-2)

    print("KERNEL_OK")
</pallas_src>

<mosaic_0001>
module attributes {stable_mosaic.version = 11 : i64} {
  func.func @_mlp_kernel(%arg0: i32, %arg1: memref<8x16xf32, #tpu.memory_space<vmem>>, %arg2: memref<16x128xf32, #tpu.memory_space<vmem>>, %arg3: memref<1x128xf32, #tpu.memory_space<vmem>>, %arg4: memref<128x128xf32, #tpu.memory_space<vmem>>, %arg5: memref<1x128xf32, #tpu.memory_space<vmem>>, %arg6: memref<128x128xf32, #tpu.memory_space<vmem>>, %arg7: memref<1x128xf32, #tpu.memory_space<vmem>>, %arg8: memref<8x128xf32, #tpu.memory_space<vmem>>) attributes {dimension_semantics = [#tpu.dimension_semantics<parallel>], iteration_bounds = array<i64: 1>, scalar_prefetch = 0 : i64, scratch_operands = 0 : i64, tpu.core_type = #tpu.core_type<tc>, window_params = [{transform_indices = @transform_0, window_bounds = array<i64: 8, 16>}, {pipeline_mode = #tpu.pipeline_mode<synchronous>, transform_indices = @transform_1, window_bounds = array<i64: 16, 128>}, {pipeline_mode = #tpu.pipeline_mode<synchronous>, transform_indices = @transform_2, window_bounds = array<i64: 1, 128>}, {pipeline_mode = #tpu.pipeline_mode<synchronous>, transform_indices = @transform_3, window_bounds = array<i64: 128, 128>}, {pipeline_mode = #tpu.pipeline_mode<synchronous>, transform_indices = @transform_4, window_bounds = array<i64: 1, 128>}, {pipeline_mode = #tpu.pipeline_mode<synchronous>, transform_indices = @transform_5, window_bounds = array<i64: 128, 128>}, {pipeline_mode = #tpu.pipeline_mode<synchronous>, transform_indices = @transform_6, window_bounds = array<i64: 1, 128>}, {transform_indices = @transform_7, window_bounds = array<i64: 8, 128>}]} {
    %c0 = arith.constant 0 : index
    %c0_0 = arith.constant 0 : index
    %0 = vector.load %arg1[%c0, %c0_0] : memref<8x16xf32, #tpu.memory_space<vmem>>, vector<8x16xf32>
    %c0_1 = arith.constant 0 : index
    %c0_2 = arith.constant 0 : index
    %1 = vector.load %arg2[%c0_1, %c0_2] : memref<16x128xf32, #tpu.memory_space<vmem>>, vector<16x128xf32>
    %cst = arith.constant dense<0.000000e+00> : vector<8x128xf32>
    %2 = tpu.matmul %0, %1, %cst {dimension_numbers = #tpu.dot_dimension_numbers<[1], [0], [0], [1], [0, 0, 1, 1], [], []>} : vector<8x16xf32>, vector<16x128xf32>, vector<8x128xf32> -> vector<8x128xf32>
    %c0_3 = arith.constant 0 : index
    %c0_4 = arith.constant 0 : index
    %3 = vector.load %arg3[%c0_3, %c0_4] : memref<1x128xf32, #tpu.memory_space<vmem>>, vector<1x128xf32>
    %4 = vector.broadcast %3 : vector<1x128xf32> to vector<8x128xf32>
    %5 = arith.addf %2, %4 : vector<8x128xf32>
    %cst_5 = arith.constant 0.000000e+00 : f32
    %6 = vector.broadcast %cst_5 : f32 to vector<8x128xf32>
    %7 = arith.maximumf %5, %6 : vector<8x128xf32>
    %c0_6 = arith.constant 0 : index
    %c0_7 = arith.constant 0 : index
    %8 = vector.load %arg4[%c0_6, %c0_7] : memref<128x128xf32, #tpu.memory_space<vmem>>, vector<128x128xf32>
    %cst_8 = arith.constant dense<0.000000e+00> : vector<8x128xf32>
    %9 = tpu.matmul %7, %8, %cst_8 {dimension_numbers = #tpu.dot_dimension_numbers<[1], [0], [0], [1], [0, 0, 1, 1], [], []>} : vector<8x128xf32>, vector<128x128xf32>, vector<8x128xf32> -> vector<8x128xf32>
    %c0_9 = arith.constant 0 : index
    %c0_10 = arith.constant 0 : index
    %10 = vector.load %arg5[%c0_9, %c0_10] : memref<1x128xf32, #tpu.memory_space<vmem>>, vector<1x128xf32>
    %11 = vector.broadcast %10 : vector<1x128xf32> to vector<8x128xf32>
    %12 = arith.addf %9, %11 : vector<8x128xf32>
    %cst_11 = arith.constant 0.000000e+00 : f32
    %13 = vector.broadcast %cst_11 : f32 to vector<8x128xf32>
    %14 = arith.maximumf %12, %13 : vector<8x128xf32>
    %c0_12 = arith.constant 0 : index
    %c0_13 = arith.constant 0 : index
    %15 = vector.load %arg6[%c0_12, %c0_13] : memref<128x128xf32, #tpu.memory_space<vmem>>, vector<128x128xf32>
    %cst_14 = arith.constant dense<0.000000e+00> : vector<8x128xf32>
    %16 = tpu.matmul %14, %15, %cst_14 {dimension_numbers = #tpu.dot_dimension_numbers<[1], [0], [0], [1], [0, 0, 1, 1], [], []>} : vector<8x128xf32>, vector<128x128xf32>, vector<8x128xf32> -> vector<8x128xf32>
    %c0_15 = arith.constant 0 : index
    %c0_16 = arith.constant 0 : index
    %17 = vector.load %arg7[%c0_15, %c0_16] : memref<1x128xf32, #tpu.memory_space<vmem>>, vector<1x128xf32>
    %18 = vector.broadcast %17 : vector<1x128xf32> to vector<8x128xf32>
    %19 = arith.addf %16, %18 : vector<8x128xf32>
    %20 = math.tanh %19 : vector<8x128xf32>
    %c0_17 = arith.constant 0 : index
    %c0_18 = arith.constant 0 : index
    %21 = vector.load %arg8[%c0_17, %c0_18] : memref<8x128xf32, #tpu.memory_space<vmem>>, vector<8x128xf32>
    tpu.vector_store %arg8[%c0_17, %c0_18], %20 {strides = array<i32>} : memref<8x128xf32, #tpu.memory_space<vmem>>, vector<8x128xf32>,
    return
  }
  func.func @transform_0(%arg0: i32) -> (i32, i32) {
    %c0_i32 = arith.constant 0 : i32
    %c0_i32_0 = arith.constant 0 : i32
    return %arg0, %c0_i32 : i32, i32
  }
  func.func @transform_1(%arg0: i32) -> (i32, i32) {
    %c0_i32 = arith.constant 0 : i32
    %c0_i32_0 = arith.constant 0 : i32
    %c0_i32_1 = arith.constant 0 : i32
    return %c0_i32, %c0_i32_0 : i32, i32
  }
  func.func @transform_2(%arg0: i32) -> (i32, i32) {
    %c0_i32 = arith.constant 0 : i32
    %c0_i32_0 = arith.constant 0 : i32
    %c0_i32_1 = arith.constant 0 : i32
    return %c0_i32, %c0_i32_0 : i32, i32
  }
  func.func @transform_3(%arg0: i32) -> (i32, i32) {
    %c0_i32 = arith.constant 0 : i32
    %c0_i32_0 = arith.constant 0 : i32
    %c0_i32_1 = arith.constant 0 : i32
    return %c0_i32, %c0_i32_0 : i32, i32
  }
  func.func @transform_4(%arg0: i32) -> (i32, i32) {
    %c0_i32 = arith.constant 0 : i32
    %c0_i32_0 = arith.constant 0 : i32
    %c0_i32_1 = arith.constant 0 : i32
    return %c0_i32, %c0_i32_0 : i32, i32
  }
  func.func @transform_5(%arg0: i32) -> (i32, i32) {
    %c0_i32 = arith.constant 0 : i32
    %c0_i32_0 = arith.constant 0 : i32
    %c0_i32_1 = arith.constant 0 : i32
    return %c0_i32, %c0_i32_0 : i32, i32
  }
  func.func @transform_6(%arg0: i32) -> (i32, i32) {
    %c0_i32 = arith.constant 0 : i32
    %c0_i32_0 = arith.constant 0 : i32
    %c0_i32_1 = arith.constant 0 : i32
    return %c0_i32, %c0_i32_0 : i32, i32
  }
  func.func @transform_7(%arg0: i32) -> (i32, i32) {
    %c0_i32 = arith.constant 0 : i32
    %c0_i32_0 = arith.constant 0 : i32
    return %arg0, %c0_i32 : i32, i32
  }
}

</mosaic_0001>

<llo_original>
// kernel: policy_network_forward.1
$region0: #{policy_network_forward.1}
  #allocation0 [shape = 'u32[]', space=smem, size = 0x4, offset = 0x4, fixed_abs, tag = 'smem constant byte address 0x4 - core index']
  #allocation1 [shape = 'u32[144,128]{1,0:T(1,128)}', space=vmem, size = 0x12000, scoped, tag = 'internal scratch']
  %s0 = inlined_call_operand.vmem [shape: f32[8,16], index: 0, kind: input, shape index: {}]
  %s1 = inlined_call_operand.vmem [shape: f32[16,128], index: 1, kind: input, shape index: {}]
  %s2 = inlined_call_operand.vmem [shape: f32[1,128], index: 2, kind: input, shape index: {}]
  %s3 = inlined_call_operand.hbm [shape: f32[128,128], index: 3, kind: input, shape index: {}]
  %s4 = inlined_call_operand.vmem [shape: f32[1,128], index: 4, kind: input, shape index: {}]
  %s5 = inlined_call_operand.hbm [shape: f32[128,128], index: 5, kind: input, shape index: {}]
  %s6 = inlined_call_operand.vmem [shape: f32[1,128], index: 6, kind: input, shape index: {}]
  %s7 = inlined_call_operand.vmem [shape: f32[8,128], index: 7, kind: output, shape index: {}]
  %s8 = sld [smem:[#allocation0]]
  $region46: #{policy_network_forward.1} parent=0
    _
  %s10 = ssub.s32 1, %s8
  %s11 = scalar_select 0, %s10, %s8
  $region1: #{policy_network_forward.1} parent=0
    #allocation2 [shape = 'u8[65536]{0}', space=vmem, size = 0x10000, scoped, tag = 'input window, operand 3, single buffered']
    #allocation3 [shape = 's32[1]{0}', space=sflag, size = 0x4, scoped, tag = 'scoped memory for policy_network_forward.1']
    #allocation4 [shape = 'u8[65536]{0}', space=vmem, size = 0x10000, scoped, tag = 'input window, operand 5, single buffered']
    #allocation5 [shape = 's32[1]{0}', space=sflag, size = 0x4, scoped, tag = 'scoped memory for policy_network_forward.1']
    %12 = vsyncpa [#allocation3], 0
    %13 = vsyncpa [#allocation5], 0
    // Predicated region
    $region2: #{policy_network_forward.1} parent=1 // pred_check
      _
    $region3: #{policy_network_forward.1} parent=1 // pred_check_branch
      %15 = sbr.rel (0) target = $region5
    $region4: #{policy_network_forward.1} parent=1 // pred_region
      _
    $region5: #{policy_network_forward.1} parent=1 // pred_fallthru
      _
    // Predicated region
    $region6: #{policy_network_forward.1} parent=1 // pred_check
      _
    $region7: #{policy_network_forward.1} parent=1 // pred_check_branch
      %17 = sbr.rel (0) target = $region9
    $region8: #{policy_network_forward.1} parent=1 // pred_region
      _
    $region9: #{policy_network_forward.1} parent=1 // pred_fallthru
      _
    // Predicated region
    $region10: #{policy_network_forward.1} parent=1 // pred_check
      _
    $region11: #{policy_network_forward.1} parent=1 // pred_check_branch
      %19 = sbr.rel (0) target = $region13
    $region12: #{policy_network_forward.1} parent=1 // pred_region
      _
    $region13: #{policy_network_forward.1} parent=1 // pred_fallthru
      _
    // Predicated region
    $region14: #{policy_network_forward.1} parent=1 // pred_check
      _
    $region15: #{policy_network_forward.1} parent=1 // pred_check_branch
      %21 = sbr.rel (0) target = $region17
    $region16: #{policy_network_forward.1} parent=1 // pred_region
      %s23 = ssub.s32 2048, 2048
      %24 = vsyncadd [#allocation3], %s23
      %s25 = sshll.u32 [#allocation2], 4
      %s26 = int_to_ptr.vmem [resolvable:$true] %s25
      %31 = dma.hbm_to_vmem [thread:$0]  %s3, 2048, %s26, [#allocation3], 128, 128, 8
    $region17: #{policy_network_forward.1} parent=1 // pred_fallthru
      _
    // Predicated region
    $region18: #{policy_network_forward.1} parent=1 // pred_check
      _
    $region19: #{policy_network_forward.1} parent=1 // pred_check_branch
      %33 = sbr.rel (0) target = $region21
    $region20: #{policy_network_forward.1} parent=1 // pred_region
      _
    $region21: #{policy_network_forward.1} parent=1 // pred_fallthru
      _
    // Predicated region
    $region22: #{policy_network_forward.1} parent=1 // pred_check
      _
    $region23: #{policy_network_forward.1} parent=1 // pred_check_branch
      %35 = sbr.rel (0) target = $region25
    $region24: #{policy_network_forward.1} parent=1 // pred_region
      %s37 = ssub.s32 2048, 2048
      %38 = vsyncadd [#allocation5], %s37
      %s39 = sshll.u32 [#allocation4], 4
      %s40 = int_to_ptr.vmem [resolvable:$true] %s39
      %45 = dma.hbm_to_vmem [thread:$0]  %s5, 2048, %s40, [#allocation5], 128, 128, 8
    $region25: #{policy_network_forward.1} parent=1 // pred_fallthru
      _
    // Predicated region
    $region26: #{policy_network_forward.1} parent=1 // pred_check
      _
    $region27: #{policy_network_forward.1} parent=1 // pred_check_branch
      %47 = sbr.rel (0) target = $region29
    $region28: #{policy_network_forward.1} parent=1 // pred_region
      _
    $region29: #{policy_network_forward.1} parent=1 // pred_fallthru
      _
    // Predicated region
    $region30: #{policy_network_forward.1} parent=1 // pred_check
      _
    $region31: #{policy_network_forward.1} parent=1 // pred_check_branch
      %49 = sbr.rel (0) target = $region33
    $region32: #{policy_network_forward.1} parent=1 // pred_region
      %50 = dma.done [#allocation3], 2048
    $region33: #{policy_network_forward.1} parent=1 // pred_fallthru
      _
    // Predicated region
    $region34: #{policy_network_forward.1} parent=1 // pred_check
      _
    $region35: #{policy_network_forward.1} parent=1 // pred_check_branch
      %52 = sbr.rel (0) target = $region37
    $region36: #{policy_network_forward.1} parent=1 // pred_region
      %53 = dma.done [#allocation5], 2048
    $region37: #{policy_network_forward.1} parent=1 // pred_fallthru
      _
    %v54 = vld [vmem:[%s0] sm:$0xff]
    %v55 = vld [vmem:[%s1] sm:$0xff]
    %v56 = vld [vmem:[%s1 + $0x8] sm:$0xff]
    %v57 = vld [vmem:[%s2] sm:$0x1]
    %v59 = vlaneseq
    %v60 = vshrl.u32 %v59, 7
    %v61 = vsub.s32 0, %v60
    %v62 = vrot.slane %v57, %v61
    %vm64 = vcmask 130048
    %v66 = vsel %vm64, %v54, 0
    %68 = vmatprep.subr.mxu0 0.0
    %69 = vmatpush1.msra.mxu0 %v55
    %70 = vmatprep.subr.mxu0 0.0
    %71 = vmatpush1.msra.mxu0 %v56
    %72 = vmatprep.subr.mxu0 0.0
    %73 = vmatpush1.msra.mxu0 0.0
    %74 = vmatprep.subr.mxu0 0.0
    %75 = vmatpush1.msra.mxu0 0.0
    %76 = vmatprep.subr.mxu0 0.0
    %77 = vmatpush1.msra.mxu0 0.0
    %78 = vmatprep.subr.mxu0 0.0
    %79 = vmatpush1.msra.mxu0 0.0
    %80 = vmatprep.subr.mxu0 0.0
    %81 = vmatpush1.msra.mxu0 0.0
    %82 = vmatprep.subr.mxu0 0.0
    %83 = vmatpush1.msra.mxu0 0.0
    %84 = vmatprep.subr.mxu0 0.0
    %85 = vmatpush1.msra.mxu0 0.0
    %86 = vmatprep.subr.mxu0 0.0
    %87 = vmatpush1.msra.mxu0 0.0
    %88 = vmatprep.subr.mxu0 0.0
    %89 = vmatpush1.msra.mxu0 0.0
    %90 = vmatprep.subr.mxu0 0.0
    %91 = vmatpush1.msra.mxu0 0.0
    %92 = vmatprep.subr.mxu0 0.0
    %93 = vmatpush1.msra.mxu0 0.0
    %94 = vmatprep.subr.mxu0 0.0
    %95 = vmatpush1.msra.mxu0 0.0
    %96 = vmatprep.subr.mxu0 0.0
    %97 = vmatpush1.msra.mxu0 0.0
    %98 = vmatprep.subr.mxu0 0.0
    %99 = vmatpush1.msra.mxu0 0.0
    %100 = vmatprep.subr.mxu0 0.0
    %101 = vmatpush1.msra.mxu0 0.0
    %102 = vmatprep.subr.mxu0 0.0
    %103 = vmatpush1.msra.mxu0 0.0
    %104 = vmatprep.subr.mxu0 0.0
    %105 = vmatpush1.msra.mxu0 0.0
    %106 = vmatprep.subr.mxu0 0.0
    %107 = vmatpush1.msra.mxu0 0.0
    %108 = vmatprep.subr.mxu0 0.0
    %109 = vmatpush1.msra.mxu0 0.0
    %110 = vmatprep.subr.mxu0 0.0
    %111 = vmatpush1.msra.mxu0 0.0
    %112 = vmatprep.subr.mxu0 0.0
    %113 = vmatpush1.msra.mxu0 0.0
    %114 = vmatprep.subr.mxu0 0.0
    %115 = vmatpush1.msra.mxu0 0.0
    %116 = vmatprep.subr.mxu0 0.0
    %117 = vmatpush1.msra.mxu0 0.0
    %118 = vmatprep.subr.mxu0 0.0
    %119 = vmatpush1.msra.mxu0 0.0
    %120 = vmatprep.subr.mxu0 0.0
    %121 = vmatpush1.msra.mxu0 0.0
    %122 = vmatprep.subr.mxu0 0.0
    %123 = vmatpush1.msra.mxu0 0.0
    %124 = vmatprep.subr.mxu0 0.0
    %125 = vmatpush1.msra.mxu0 0.0
    %126 = vmatprep.subr.mxu0 0.0
    %127 = vmatpush1.msra.mxu0 0.0
    %128 = vmatprep.subr.mxu0 0.0
    %129 = vmatpush1.msra.mxu0 0.0
    %130 = vmatprep.subr.mxu0 0.0
    %131 = vmatpush1.msra.mxu0 0.0
    %132 = vmatprep.mubr.f32.mxu0 0.0
    %133 = vmatmul.mubr.f32.gmra.mrb[0].mxu0 %v66
    %v134 = vpop.f32.mrb[0].mxu0
    %v135 = vadd.f32 %v62, %v134
    %v136 = vpop.f32.mrb[0].mxu0
    %137 = vdwg.mxu0
    %v138 = vmax.f32 %v135, 0.0
    %v139 = vld [vmem:[#allocation2] sm:$0xff]
    %v140 = vld [vmem:[#allocation2 + $0x8] sm:$0xff]
    %v141 = vld [vmem:[#allocation2 + $0x10] sm:$0xff]
    %v142 = vld [vmem:[#allocation2 + $0x18] sm:$0xff]
    %v143 = vld [vmem:[#allocation2 + $0x20] sm:$0xff]
    %v144 = vld [vmem:[#allocation2 + $0x28] sm:$0xff]
    %v145 = vld [vmem:[#allocation2 + $0x30] sm:$0xff]
    %v146 = vld [vmem:[#allocation2 + $0x38] sm:$0xff]
    %v147 = vld [vmem:[#allocation2 + $0x40] sm:$0xff]
    %v148 = vld [vmem:[#allocation2 + $0x48] sm:$0xff]
    %v149 = vld [vmem:[#allocation2 + $0x50] sm:$0xff]
    %v150 = vld [vmem:[#allocation2 + $0x58] sm:$0xff]
    %v151 = vld [vmem:[#allocation2 + $0x60] sm:$0xff]
    %v152 = vld [vmem:[#allocation2 + $0x68] sm:$0xff]
    %v153 = vld [vmem:[#allocation2 + $0x70] sm:$0xff]
    %v154 = vld [vmem:[#allocation2 + $0x78] sm:$0xff]
    %v155 = vld [vmem:[%s4] sm:$0x1]
    %v157 = vlaneseq
    %v158 = vshrl.u32 %v157, 7
    %v159 = vsub.s32 0, %v158
    %v160 = vrot.slane %v155, %v159
    %162 = vmatprep.subr.mxu0 0.0
    %163 = vmatpush1.msra.mxu0 %v139
    %164 = vmatprep.subr.mxu0 0.0
    %165 = vmatpush1.msra.mxu0 %v140
    %166 = vmatprep.subr.mxu0 0.0
    %167 = vmatpush1.msra.mxu0 %v141
    %168 = vmatprep.subr.mxu0 0.0
    %169 = vmatpush1.msra.mxu0 %v142
    %170 = vmatprep.subr.mxu0 0.0
    %171 = vmatpush1.msra.mxu0 %v143
    %172 = vmatprep.subr.mxu0 0.0
    %173 = vmatpush1.msra.mxu0 %v144
    %174 = vmatprep.subr.mxu0 0.0
    %175 = vmatpush1.msra.mxu0 %v145
    %176 = vmatprep.subr.mxu0 0.0
    %177 = vmatpush1.msra.mxu0 %v146
    %178 = vmatprep.subr.mxu0 0.0
    %179 = vmatpush1.msra.mxu0 %v147
    %180 = vmatprep.subr.mxu0 0.0
    %181 = vmatpush1.msra.mxu0 %v148
    %182 = vmatprep.subr.mxu0 0.0
    %183 = vmatpush1.msra.mxu0 %v149
    %184 = vmatprep.subr.mxu0 0.0
    %185 = vmatpush1.msra.mxu0 %v150
    %186 = vmatprep.subr.mxu0 0.0
    %187 = vmatpush1.msra.mxu0 %v151
    %188 = vmatprep.subr.mxu0 0.0
    %189 = vmatpush1.msra.mxu0 %v152
    %190 = vmatprep.subr.mxu0 0.0
    %191 = vmatpush1.msra.mxu0 %v153
    %192 = vmatprep.subr.mxu0 0.0
    %193 = vmatpush1.msra.mxu0 %v154
    %194 = vmatprep.subr.mxu0 0.0
    %195 = vmatpush1.msra.mxu0 0.0
    %196 = vmatprep.subr.mxu0 0.0
    %197 = vmatpush1.msra.mxu0 0.0
    %198 = vmatprep.subr.mxu0 0.0
    %199 = vmatpush1.msra.mxu0 0.0
    %200 = vmatprep.subr.mxu0 0.0
    %201 = vmatpush1.msra.mxu0 0.0
    %202 = vmatprep.subr.mxu0 0.0
    %203 = vmatpush1.msra.mxu0 0.0
    %204 = vmatprep.subr.mxu0 0.0
    %205 = vmatpush1.msra.mxu0 0.0
    %206 = vmatprep.subr.mxu0 0.0
    %207 = vmatpush1.msra.mxu0 0.0
    %208 = vmatprep.subr.mxu0 0.0
    %209 = vmatpush1.msra.mxu0 0.0
    %210 = vmatprep.subr.mxu0 0.0
    %211 = vmatpush1.msra.mxu0 0.0
    %212 = vmatprep.subr.mxu0 0.0
    %213 = vmatpush1.msra.mxu0 0.0
    %214 = vmatprep.subr.mxu0 0.0
    %215 = vmatpush1.msra.mxu0 0.0
    %216 = vmatprep.subr.mxu0 0.0
    %217 = vmatpush1.msra.mxu0 0.0
    %218 = vmatprep.subr.mxu0 0.0
    %219 = vmatpush1.msra.mxu0 0.0
    %220 = vmatprep.subr.mxu0 0.0
    %221 = vmatpush1.msra.mxu0 0.0
    %222 = vmatprep.subr.mxu0 0.0
    %223 = vmatpush1.msra.mxu0 0.0
    %224 = vmatprep.subr.mxu0 0.0
    %225 = vmatpush1.msra.mxu0 0.0
    %226 = vmatprep.mubr.f32.mxu0 0.0
    %227 = vmatmul.mubr.f32.gmra.mrb[0].mxu0 %v138
    %v228 = vpop.f32.mrb[0].mxu0
    %v229 = vadd.f32 %v160, %v228
    %v230 = vpop.f32.mrb[0].mxu0
    %231 = vdwg.mxu0
    %v232 = vmax.f32 %v229, 0.0
    %v233 = vld [vmem:[#allocation4] sm:$0xff]
    %v234 = vld [vmem:[#allocation4 + $0x8] sm:$0xff]
    %v235 = vld [vmem:[#allocation4 + $0x10] sm:$0xff]
    %v236 = vld [vmem:[#allocation4 + $0x18] sm:$0xff]
    %v237 = vld [vmem:[#allocation4 + $0x20] sm:$0xff]
    %v238 = vld [vmem:[#allocation4 + $0x28] sm:$0xff]
    %v239 = vld [vmem:[#allocation4 + $0x30] sm:$0xff]
    %v240 = vld [vmem:[#allocation4 + $0x38] sm:$0xff]
    %v241 = vld [vmem:[#allocation4 + $0x40] sm:$0xff]
    %v242 = vld [vmem:[#allocation4 + $0x48] sm:$0xff]
    %v243 = vld [vmem:[#allocation4 + $0x50] sm:$0xff]
    %v244 = vld [vmem:[#allocation4 + $0x58] sm:$0xff]
    %v245 = vld [vmem:[#allocation4 + $0x60] sm:$0xff]
    %v246 = vld [vmem:[#allocation4 + $0x68] sm:$0xff]
    %v247 = vld [vmem:[#allocation4 + $0x70] sm:$0xff]
    %v248 = vld [vmem:[#allocation4 + $0x78] sm:$0xff]
    %v249 = vld [vmem:[%s6] sm:$0x1]
    %v251 = vlaneseq
    %v252 = vshrl.u32 %v251, 7
    %v253 = vsub.s32 0, %v252
    %v254 = vrot.slane %v249, %v253
    %256 = vmatprep.subr.mxu0 0.0
    %257 = vmatpush1.msra.mxu0 %v233
    %258 = vmatprep.subr.mxu0 0.0
    %259 = vmatpush1.msra.mxu0 %v234
    %260 = vmatprep.subr.mxu0 0.0
    %261 = vmatpush1.msra.mxu0 %v235
    %262 = vmatprep.subr.mxu0 0.0
    %263 = vmatpush1.msra.mxu0 %v236
    %264 = vmatprep.subr.mxu0 0.0
    %265 = vmatpush1.msra.mxu0 %v237
    %266 = vmatprep.subr.mxu0 0.0
    %267 = vmatpush1.msra.mxu0 %v238
    %268 = vmatprep.subr.mxu0 0.0
    %269 = vmatpush1.msra.mxu0 %v239
    %270 = vmatprep.subr.mxu0 0.0
    %271 = vmatpush1.msra.mxu0 %v240
    %272 = vmatprep.subr.mxu0 0.0
    %273 = vmatpush1.msra.mxu0 %v241
    %274 = vmatprep.subr.mxu0 0.0
    %275 = vmatpush1.msra.mxu0 %v242
    %276 = vmatprep.subr.mxu0 0.0
    %277 = vmatpush1.msra.mxu0 %v243
    %278 = vmatprep.subr.mxu0 0.0
    %279 = vmatpush1.msra.mxu0 %v244
    %280 = vmatprep.subr.mxu0 0.0
    %281 = vmatpush1.msra.mxu0 %v245
    %282 = vmatprep.subr.mxu0 0.0
    %283 = vmatpush1.msra.mxu0 %v246
    %284 = vmatprep.subr.mxu0 0.0
    %285 = vmatpush1.msra.mxu0 %v247
    %286 = vmatprep.subr.mxu0 0.0
    %287 = vmatpush1.msra.mxu0 %v248
    %288 = vmatprep.subr.mxu0 0.0
    %289 = vmatpush1.msra.mxu0 0.0
    %290 = vmatprep.subr.mxu0 0.0
    %291 = vmatpush1.msra.mxu0 0.0
    %292 = vmatprep.subr.mxu0 0.0
    %293 = vmatpush1.msra.mxu0 0.0
    %294 = vmatprep.subr.mxu0 0.0
    %295 = vmatpush1.msra.mxu0 0.0
    %296 = vmatprep.subr.mxu0 0.0
    %297 = vmatpush1.msra.mxu0 0.0
    %298 = vmatprep.subr.mxu0 0.0
    %299 = vmatpush1.msra.mxu0 0.0
    %300 = vmatprep.subr.mxu0 0.0
    %301 = vmatpush1.msra.mxu0 0.0
    %302 = vmatprep.subr.mxu0 0.0
    %303 = vmatpush1.msra.mxu0 0.0
    %304 = vmatprep.subr.mxu0 0.0
    %305 = vmatpush1.msra.mxu0 0.0
    %306 = vmatprep.subr.mxu0 0.0
    %307 = vmatpush1.msra.mxu0 0.0
    %308 = vmatprep.subr.mxu0 0.0
    %309 = vmatpush1.msra.mxu0 0.0
    %310 = vmatprep.subr.mxu0 0.0
    %311 = vmatpush1.msra.mxu0 0.0
    %312 = vmatprep.subr.mxu0 0.0
    %313 = vmatpush1.msra.mxu0 0.0
    %314 = vmatprep.subr.mxu0 0.0
    %315 = vmatpush1.msra.mxu0 0.0
    %316 = vmatprep.subr.mxu0 0.0
    %317 = vmatpush1.msra.mxu0 0.0
    %318 = vmatprep.subr.mxu0 0.0
    %319 = vmatpush1.msra.mxu0 0.0
    %320 = vmatprep.mubr.f32.mxu0 0.0
    %321 = vmatmul.mubr.f32.gmra.mrb[0].mxu0 %v232
    %v322 = vpop.f32.mrb[0].mxu0
    %v323 = vadd.f32 %v254, %v322
    %v324 = vpop.f32.mrb[0].mxu0
    %325 = vdwg.mxu0
    %v326 = vtanh.pop %v323
    %327 = vst [vmem:[%s7] sm:$0xff] %v326
    // Predicated region
    $region38: #{policy_network_forward.1} parent=1 // pred_check
      _
    $region39: #{policy_network_forward.1} parent=1 // pred_check_branch
      %329 = sbr.rel (0) target = $region41
    $region40: #{policy_network_forward.1} parent=1 // pred_region
      _
    $region41: #{policy_network_forward.1} parent=1 // pred_fallthru
      _
    // Predicated region
    $region42: #{policy_network_forward.1} parent=1 // pred_check
      _
    $region43: #{policy_network_forward.1} parent=1 // pred_check_branch
      %331 = sbr.rel (0) target = $region45
    $region44: #{policy_network_forward.1} parent=1 // pred_region
      _
    $region45: #{policy_network_forward.1} parent=1 // pred_fallthru
      _
    %332 = vsyncpa [#allocation3], 1
    %333 = vsyncpa [#allocation5], 1

</llo_original>
